<compile_context>
chip_gen: v7x
topology: tpu7x:2x2x1
jax: 0.10.0
libtpu: 0.0.40
codegen_flags: <defaults>
</compile_context>

<pallas_src>
import functools

import jax
import jax.numpy as jnp
from jax.experimental import pallas as pl
from jax.experimental.pallas import tpu as pltpu

LANE = 128  # MXU / vreg lane width


def _round_up(x, m):
    return (x + m - 1) // m * m


def _cdiv(a, b):
    return -(-a // b)


# ---------------------------------------------------------------------------
# Fused Pallas kernel: full trunk + concatenated heads for one batch tile.
# ---------------------------------------------------------------------------
def _fused_mlp_kernel(*refs, num_trunk: int):
    """refs = (x_ref, w0, b0, ..., w_{T-1}, b_{T-1}, w_head, b_head, o_ref).

    x_ref:   (TB, F)          f32   (unpadded features; cast to bf16 in-kernel)
    w_0:     (F, H_pad)       bf16  (VMEM-resident: constant index_map)
    w_t>0:   (H_pad, H_pad)   bf16
    b_t:     (1, H_pad)       f32
    w_head:  (H_pad, S_pad)   bf16  (all heads concatenated + lane-padded)
    b_head:  (1, S_pad)       f32
    o_ref:   (TB, S_pad)      out dtype
    """
    x_ref = refs[0]
    o_ref = refs[-1]

    h = x_ref[...].astype(jnp.bfloat16)                  # in-kernel cast
    for t in range(num_trunk):                           # static unroll (small)
        w = refs[1 + 2 * t][...]
        b = refs[2 + 2 * t][...]
        y = jnp.dot(h, w, preferred_element_type=jnp.float32)   # MXU, f32 acc
        y = jnp.maximum(y + b, 0.0)                      # bias+ReLU in f32
        h = y.astype(jnp.bfloat16)

    wh = refs[1 + 2 * num_trunk][...]
    bh = refs[2 + 2 * num_trunk][...]
    y = jnp.dot(h, wh, preferred_element_type=jnp.float32) + bh
    o_ref[...] = y.astype(o_ref.dtype)


# ---------------------------------------------------------------------------
# Parameter construction (PyTorch-Linear-like uniform init, stored unpadded f32)
# ---------------------------------------------------------------------------
def init_mahjong_nn(key, n_features, hidden_size, num_layers, label_sizes):
    def make_linear(k, fan_in, fan_out):
        kw, kb = jax.random.split(k)
        bound = 1.0 / jnp.sqrt(fan_in)
        w = jax.random.uniform(kw, (fan_in, fan_out), jnp.float32, -bound, bound)
        b = jax.random.uniform(kb, (1, fan_out), jnp.float32, -bound, bound)
        return w, b

    params = {"trunk": [], "heads": []}
    keys = jax.random.split(key, (num_layers - 1) + len(label_sizes))
    ki = 0
    params["trunk"].append(make_linear(keys[ki], n_features, hidden_size)); ki += 1
    for _ in range(num_layers - 2):
        params["trunk"].append(make_linear(keys[ki], hidden_size, hidden_size)); ki += 1
    for hs in label_sizes:
        params["heads"].append(make_linear(keys[ki], hidden_size, hs)); ki += 1
    return params


def prepare_kernel_params(params):
    """Zero-pad hidden/head dims to 128-multiples, cast weights to bf16,
    concatenate heads.  The first trunk weight keeps in-dim == n_features so
    x can be streamed unpadded (no wrapper-side pad/cast pass)."""
    def pad2(a, rows, cols):
        return jnp.pad(a, ((0, rows - a.shape[0]), (0, cols - a.shape[1])))

    prepared = {"trunk": []}
    for li, (w, b) in enumerate(params["trunk"]):
        in_p = w.shape[0] if li == 0 else _round_up(w.shape[0], LANE)
        out_p = _round_up(w.shape[1], LANE)
        prepared["trunk"].append(
            (pad2(w, in_p, out_p).astype(jnp.bfloat16), pad2(b, 1, out_p))
        )

    # One lane-dense matmul for all heads.
    wh = jnp.concatenate([w for (w, _) in params["heads"]], axis=1)
    bh = jnp.concatenate([b for (_, b) in params["heads"]], axis=1)
    hid_p = _round_up(wh.shape[0], LANE)
    sum_p = _round_up(wh.shape[1], LANE)
    prepared["head"] = (pad2(wh, hid_p, sum_p).astype(jnp.bfloat16),
                        pad2(bh, 1, sum_p))
    return prepared


# ---------------------------------------------------------------------------
# Batch tiling policy: big M tiles, minimal batch padding, even grid on v7x.
# ---------------------------------------------------------------------------
def _choose_batch_tiling(batch, max_tile=512, align=16):
    """Returns (B_pad, batch_tile, grid_len).

    * batch is padded only to the 16-row alignment (bf16 sublane packing),
      never up to the tile size.
    * The tile is as large as possible (<= max_tile rows) so the MXU's M dim
      is full and per-step overhead (~0.35 us) is amortized.
    * When the batch is large enough that half-tiles still fill >=128 MXU
      rows, the grid length is kept even so dimension_semantics=("parallel",)
      can shard across v7x's two TensorCores.
    """
    b_pad = _round_up(max(batch, 1), align)
    n = _cdiv(b_pad, max_tile)
    if n == 1 and b_pad >= 256:
        n = 2                         # two big steps -> both v7x TCs busy
    elif n > 1 and n % 2:
        n += 1                        # even grid length for v7x megacore
    tile = _round_up(_cdiv(b_pad, n), align)
    return tile * n, tile, n


def _resident_spec(shape):
    """Constant-index (VMEM-resident) spec; single-buffered where supported so
    weights aren't needlessly double-buffered (v7x VMEM budget)."""
    idx = lambda i: (0, 0)
    if hasattr(pl, "Buffered"):
        try:
            return pl.BlockSpec(shape, idx, pipeline_mode=pl.Buffered(1))
        except TypeError:
            pass
    return pl.BlockSpec(shape, idx)


# ---------------------------------------------------------------------------
# Forward: one fused pallas_call, gridded over batch tiles.
# ---------------------------------------------------------------------------
def mahjong_nn_forward(prepared, x, label_sizes, *, max_batch_tile=512,
                       out_dtype=jnp.float32):
    B, F = x.shape
    assert F == prepared["trunk"][0][0].shape[0], "feature dim mismatch"
    S_pad = prepared["head"][0].shape[1]

    B_pad, batch_tile, grid_b = _choose_batch_tiling(B, max_batch_tile)
    # Only pad batch rows (if needed); features stay unpadded, dtype stays f32
    # -- the bf16 cast happens inside the kernel, no extra HBM pass.
    x_p = x if B_pad == B else jnp.pad(x, ((0, B_pad - B), (0, 0)))

    num_trunk = len(prepared["trunk"])
    all_layers = prepared["trunk"] + [prepared["head"]]

    flat_params = []
    in_specs = [pl.BlockSpec((batch_tile, F), lambda i: (i, 0))]
    for w, b in all_layers:
        flat_params += [w, b]
        # Full-array specs with constant index_map -> weights stay VMEM-resident.
        in_specs.append(_resident_spec(w.shape))
        in_specs.append(_resident_spec(b.shape))

    out_itemsize = jnp.dtype(out_dtype).itemsize
    flops = 2 * B_pad * sum(int(w.shape[0]) * int(w.shape[1]) for w, _ in all_layers)
    bytes_accessed = (
        int(x_p.size) * 4
        + sum(int(w.size) * 2 + int(b.size) * 4 for w, b in all_layers)
        + B_pad * S_pad * out_itemsize
    )

    # Explicit VMEM budget: resident weights (single-buffered) + double-buffered
    # activation/output tiles, with headroom; clamped so it stays viable on
    # v7x's 64 MiB physical VMEM while never dropping below the 32 MiB default.
    resident_bytes = sum(int(w.size) * 2 + int(b.size) * 4 for w, b in all_layers)
    io_bytes = 2 * batch_tile * F * 4 + 2 * batch_tile * S_pad * out_itemsize
    needed = resident_bytes + io_bytes
    try:
        vmem_cap = int(pltpu.get_tpu_info().vmem_capacity_bytes)
    except Exception:
        vmem_cap = 64 << 20  # v7x per-TC VMEM: smallest across supported chips
    vmem_limit = int(min(max(needed + needed // 2, 32 << 20), (vmem_cap * 3) // 4))

    kernel = functools.partial(_fused_mlp_kernel, num_trunk=num_trunk)
    out = pl.pallas_call(
        kernel,
        out_shape=jax.ShapeDtypeStruct((B_pad, S_pad), out_dtype),
        grid_spec=pltpu.PrefetchScalarGridSpec(
            num_scalar_prefetch=0,
            grid=(grid_b,),
            in_specs=in_specs,
            out_specs=pl.BlockSpec((batch_tile, S_pad), lambda i: (i, 0)),
        ),
        compiler_params=pltpu.CompilerParams(
            dimension_semantics=("parallel",),
            vmem_limit_bytes=vmem_limit,
        ),
        cost_estimate=pl.CostEstimate(
            flops=flops, transcendentals=0, bytes_accessed=bytes_accessed
        ),
    )(x_p, *flat_params)

    # Strip batch/lane padding and split the concatenated logits per head.
    total = sum(label_sizes)
    logits = out[:B, :total]
    outs, off = [], 0
    for hs in label_sizes:
        outs.append(logits[:, off:off + hs])
        off += hs
    return outs


# ---------------------------------------------------------------------------
# Pure-JAX reference (same bf16 weights / f32 epilogue) for correctness check.
# ---------------------------------------------------------------------------
def mahjong_nn_reference(params, x):
    h = x.astype(jnp.bfloat16)
    for w, b in params["trunk"]:
        y = jnp.dot(h, w.astype(jnp.bfloat16), preferred_element_type=jnp.float32) + b
        h = jnp.maximum(y, 0.0).astype(jnp.bfloat16)
    return [
        jnp.dot(h, w.astype(jnp.bfloat16), preferred_element_type=jnp.float32) + b
        for w, b in params["heads"]
    ]


# ---------------------------------------------------------------------------
# Demo
# ---------------------------------------------------------------------------
if __name__ == "__main__":
    # Synthetic stand-ins for DataSet.n_features / DataSet.label_sizes.
    N_FEATURES = 64
    HIDDEN_SIZE = 32
    NUM_LAYERS = 3            # Linear+ReLU, Linear+ReLU, then heads
    LABEL_SIZES = [34, 8, 4]  # multi-head classification outputs
    BATCH = 32                # demo batch: single large grid step

    # TODO(synk): optimizer / LR scheduler / training loop / checkpoint I/O from
    # the PyTorch module are out of scope for a forward-pass kernel.

    key = jax.random.PRNGKey(0)
    k_params, k_x = jax.random.split(key)

    params = init_mahjong_nn(k_params, N_FEATURES, HIDDEN_SIZE, NUM_LAYERS,
                             LABEL_SIZES)
    x = jax.random.normal(k_x, (BATCH, N_FEATURES), jnp.float32)

    prepared = prepare_kernel_params(params)
    outs = mahjong_nn_forward(prepared, x, LABEL_SIZES)
    outs = [jax.block_until_ready(o) for o in outs]

    refs = mahjong_nn_reference(params, x)
    for o, r, hs in zip(outs, refs, LABEL_SIZES):
        assert o.shape == (BATCH, hs), (o.shape, (BATCH, hs))
        assert jnp.allclose(o, r, atol=2e-2, rtol=2e-2), \
            float(jnp.max(jnp.abs(o - jnp.asarray(r, jnp.float32))))

    print("KERNEL_OK")
</pallas_src>

<mosaic_0001>
module attributes {stable_mosaic.version = 11 : i64} {
  func.func @_fused_mlp_kernel(%arg0: i32, %arg1: memref<32x64xf32, #tpu.memory_space<vmem>>, %arg2: memref<64x128xbf16, #tpu.memory_space<vmem>>, %arg3: memref<1x128xf32, #tpu.memory_space<vmem>>, %arg4: memref<128x128xbf16, #tpu.memory_space<vmem>>, %arg5: memref<1x128xf32, #tpu.memory_space<vmem>>, %arg6: memref<128x128xbf16, #tpu.memory_space<vmem>>, %arg7: memref<1x128xf32, #tpu.memory_space<vmem>>, %arg8: memref<32x128xf32, #tpu.memory_space<vmem>>) attributes {dimension_semantics = [#tpu.dimension_semantics<parallel>], iteration_bounds = array<i64: 1>, scalar_prefetch = 0 : i64, scratch_operands = 0 : i64, tpu.core_type = #tpu.core_type<tc>, window_params = [{transform_indices = @transform_0, window_bounds = array<i64: 32, 64>}, {pipeline_mode = #tpu.pipeline_mode<synchronous>, transform_indices = @transform_1, window_bounds = array<i64: 64, 128>}, {pipeline_mode = #tpu.pipeline_mode<synchronous>, transform_indices = @transform_2, window_bounds = array<i64: 1, 128>}, {pipeline_mode = #tpu.pipeline_mode<synchronous>, transform_indices = @transform_3, window_bounds = array<i64: 128, 128>}, {pipeline_mode = #tpu.pipeline_mode<synchronous>, transform_indices = @transform_4, window_bounds = array<i64: 1, 128>}, {pipeline_mode = #tpu.pipeline_mode<synchronous>, transform_indices = @transform_5, window_bounds = array<i64: 128, 128>}, {pipeline_mode = #tpu.pipeline_mode<synchronous>, transform_indices = @transform_6, window_bounds = array<i64: 1, 128>}, {transform_indices = @transform_7, window_bounds = array<i64: 32, 128>}]} {
    %c0 = arith.constant 0 : index
    %c0_0 = arith.constant 0 : index
    %0 = vector.load %arg1[%c0, %c0_0] : memref<32x64xf32, #tpu.memory_space<vmem>>, vector<32x64xf32>
    %1 = arith.truncf %0 : vector<32x64xf32> to vector<32x64xbf16>
    %c0_1 = arith.constant 0 : index
    %c0_2 = arith.constant 0 : index
    %2 = vector.load %arg2[%c0_1, %c0_2] : memref<64x128xbf16, #tpu.memory_space<vmem>>, vector<64x128xbf16>
    %c0_3 = arith.constant 0 : index
    %c0_4 = arith.constant 0 : index
    %3 = vector.load %arg3[%c0_3, %c0_4] : memref<1x128xf32, #tpu.memory_space<vmem>>, vector<1x128xf32>
    %cst = arith.constant dense<0.000000e+00> : vector<32x128xf32>
    %4 = tpu.matmul %1, %2, %cst {dimension_numbers = #tpu.dot_dimension_numbers<[1], [0], [0], [1], [0, 0, 1, 1], [], []>} : vector<32x64xbf16>, vector<64x128xbf16>, vector<32x128xf32> -> vector<32x128xf32>
    %5 = vector.broadcast %3 : vector<1x128xf32> to vector<32x128xf32>
    %6 = arith.addf %4, %5 : vector<32x128xf32>
    %cst_5 = arith.constant 0.000000e+00 : f32
    %7 = vector.broadcast %cst_5 : f32 to vector<32x128xf32>
    %8 = arith.maximumf %6, %7 : vector<32x128xf32>
    %9 = arith.truncf %8 : vector<32x128xf32> to vector<32x128xbf16>
    %c0_6 = arith.constant 0 : index
    %c0_7 = arith.constant 0 : index
    %10 = vector.load %arg4[%c0_6, %c0_7] : memref<128x128xbf16, #tpu.memory_space<vmem>>, vector<128x128xbf16>
    %c0_8 = arith.constant 0 : index
    %c0_9 = arith.constant 0 : index
    %11 = vector.load %arg5[%c0_8, %c0_9] : memref<1x128xf32, #tpu.memory_space<vmem>>, vector<1x128xf32>
    %cst_10 = arith.constant dense<0.000000e+00> : vector<32x128xf32>
    %12 = tpu.matmul %9, %10, %cst_10 {dimension_numbers = #tpu.dot_dimension_numbers<[1], [0], [0], [1], [0, 0, 1, 1], [], []>} : vector<32x128xbf16>, vector<128x128xbf16>, vector<32x128xf32> -> vector<32x128xf32>
    %13 = vector.broadcast %11 : vector<1x128xf32> to vector<32x128xf32>
    %14 = arith.addf %12, %13 : vector<32x128xf32>
    %cst_11 = arith.constant 0.000000e+00 : f32
    %15 = vector.broadcast %cst_11 : f32 to vector<32x128xf32>
    %16 = arith.maximumf %14, %15 : vector<32x128xf32>
    %17 = arith.truncf %16 : vector<32x128xf32> to vector<32x128xbf16>
    %c0_12 = arith.constant 0 : index
    %c0_13 = arith.constant 0 : index
    %18 = vector.load %arg6[%c0_12, %c0_13] : memref<128x128xbf16, #tpu.memory_space<vmem>>, vector<128x128xbf16>
    %c0_14 = arith.constant 0 : index
    %c0_15 = arith.constant 0 : index
    %19 = vector.load %arg7[%c0_14, %c0_15] : memref<1x128xf32, #tpu.memory_space<vmem>>, vector<1x128xf32>
    %cst_16 = arith.constant dense<0.000000e+00> : vector<32x128xf32>
    %20 = tpu.matmul %17, %18, %cst_16 {dimension_numbers = #tpu.dot_dimension_numbers<[1], [0], [0], [1], [0, 0, 1, 1], [], []>} : vector<32x128xbf16>, vector<128x128xbf16>, vector<32x128xf32> -> vector<32x128xf32>
    %21 = vector.broadcast %19 : vector<1x128xf32> to vector<32x128xf32>
    %22 = arith.addf %20, %21 : vector<32x128xf32>
    %c0_17 = arith.constant 0 : index
    %c0_18 = arith.constant 0 : index
    %23 = vector.load %arg8[%c0_17, %c0_18] : memref<32x128xf32, #tpu.memory_space<vmem>>, vector<32x128xf32>
    tpu.vector_store %arg8[%c0_17, %c0_18], %22 {strides = array<i32>} : memref<32x128xf32, #tpu.memory_space<vmem>>, vector<32x128xf32>,
    return
  }
  func.func @transform_0(%arg0: i32) -> (i32, i32) {
    %c0_i32 = arith.constant 0 : i32
    %c0_i32_0 = arith.constant 0 : i32
    return %arg0, %c0_i32 : i32, i32
  }
  func.func @transform_1(%arg0: i32) -> (i32, i32) {
    %c0_i32 = arith.constant 0 : i32
    %c0_i32_0 = arith.constant 0 : i32
    %c0_i32_1 = arith.constant 0 : i32
    return %c0_i32, %c0_i32_0 : i32, i32
  }
  func.func @transform_2(%arg0: i32) -> (i32, i32) {
    %c0_i32 = arith.constant 0 : i32
    %c0_i32_0 = arith.constant 0 : i32
    %c0_i32_1 = arith.constant 0 : i32
    return %c0_i32, %c0_i32_0 : i32, i32
  }
  func.func @transform_3(%arg0: i32) -> (i32, i32) {
    %c0_i32 = arith.constant 0 : i32
    %c0_i32_0 = arith.constant 0 : i32
    %c0_i32_1 = arith.constant 0 : i32
    return %c0_i32, %c0_i32_0 : i32, i32
  }
  func.func @transform_4(%arg0: i32) -> (i32, i32) {
    %c0_i32 = arith.constant 0 : i32
    %c0_i32_0 = arith.constant 0 : i32
    %c0_i32_1 = arith.constant 0 : i32
    return %c0_i32, %c0_i32_0 : i32, i32
  }
  func.func @transform_5(%arg0: i32) -> (i32, i32) {
    %c0_i32 = arith.constant 0 : i32
    %c0_i32_0 = arith.constant 0 : i32
    %c0_i32_1 = arith.constant 0 : i32
    return %c0_i32, %c0_i32_0 : i32, i32
  }
  func.func @transform_6(%arg0: i32) -> (i32, i32) {
    %c0_i32 = arith.constant 0 : i32
    %c0_i32_0 = arith.constant 0 : i32
    %c0_i32_1 = arith.constant 0 : i32
    return %c0_i32, %c0_i32_0 : i32, i32
  }
  func.func @transform_7(%arg0: i32) -> (i32, i32) {
    %c0_i32 = arith.constant 0 : i32
    %c0_i32_0 = arith.constant 0 : i32
    return %arg0, %c0_i32 : i32, i32
  }
}

</mosaic_0001>

<llo_original>
// kernel: tpu_custom_call.1
$region0: #{tpu_custom_call.1}
  #allocation0 [shape = 'u32[]', space=smem, size = 0x4, offset = 0x4, fixed_abs, tag = 'smem constant byte address 0x4 - core index']
  #allocation1 [shape = 'u32[144,128]{1,0:T(1,128)}', space=vmem, size = 0x12000, scoped, tag = 'internal scratch']
  %s0 = inlined_call_operand.hbm [shape: f32[32,64], index: 0, kind: input, shape index: {}]
  %s1 = inlined_call_operand.hbm [shape: bf16[64,128], index: 1, kind: input, shape index: {}]
  %s2 = inlined_call_operand.vmem [shape: f32[1,128], index: 2, kind: input, shape index: {}]
  %s3 = inlined_call_operand.hbm [shape: bf16[128,128], index: 3, kind: input, shape index: {}]
  %s4 = inlined_call_operand.vmem [shape: f32[1,128], index: 4, kind: input, shape index: {}]
  %s5 = inlined_call_operand.hbm [shape: bf16[128,128], index: 5, kind: input, shape index: {}]
  %s6 = inlined_call_operand.vmem [shape: f32[1,128], index: 6, kind: input, shape index: {}]
  %s7 = inlined_call_operand.hbm [shape: f32[32,128], index: 7, kind: output, shape index: {}]
  %s8 = sld [smem:[#allocation0]]
  $region54: #{tpu_custom_call.1} parent=0
    _
  %s10 = ssub.s32 1, %s8
  %s11 = scalar_select 0, %s10, %s8
  $region1: #{tpu_custom_call.1} parent=0
    #allocation2 [shape = 'u8[16384]{0}', space=vmem, size = 0x4000, scoped, tag = 'input window, operand 0, single buffered']
    #allocation3 [shape = 's32[1]{0}', space=sflag, size = 0x4, scoped, tag = 'scoped memory for tpu_custom_call.1']
    #allocation4 [shape = 's32[1]{0}', space=sflag, size = 0x4, scoped, tag = 'scoped memory for tpu_custom_call.1']
    #allocation5 [shape = 'u8[16384]{0}', space=vmem, size = 0x4000, scoped, tag = 'input window, operand 1, single buffered']
    #allocation6 [shape = 's32[1]{0}', space=sflag, size = 0x4, scoped, tag = 'scoped memory for tpu_custom_call.1']
    #allocation7 [shape = 'u8[32768]{0}', space=vmem, size = 0x8000, scoped, tag = 'input window, operand 3, single buffered']
    #allocation8 [shape = 'u8[32768]{0}', space=vmem, size = 0x8000, scoped, tag = 'input window, operand 5, single buffered']
    #allocation9 [shape = 's32[1]{0}', space=sflag, size = 0x4, scoped, tag = 'scoped memory for tpu_custom_call.1']
    #allocation10 [shape = 'u8[16384]{0}', space=vmem, size = 0x4000, scoped, tag = 'output window, operand 0, single buffered']
    %12 = vsyncpa [#allocation3], 0
    %13 = vsyncpa [#allocation6], 0
    %14 = vsyncpa [#allocation9], 0
    %15 = vsyncpa [#allocation4], 0
    // Predicated region
    $region2: #{tpu_custom_call.1} parent=1 // pred_check
      _
    $region3: #{tpu_custom_call.1} parent=1 // pred_check_branch
      %17 = sbr.rel (0) target = $region5
    $region4: #{tpu_custom_call.1} parent=1 // pred_region
      %s19 = ssub.s32 512, 512
      %20 = vsyncadd [#allocation3], %s19
      %s21 = sshll.u32 [#allocation2], 4
      %s22 = int_to_ptr.vmem [resolvable:$true] %s21
      %27 = dma.hbm_to_vmem [thread:$0]  %s0, 512, %s22, [#allocation3], 128, 128, 8
    $region5: #{tpu_custom_call.1} parent=1 // pred_fallthru
      _
    // Predicated region
    $region6: #{tpu_custom_call.1} parent=1 // pred_check
      _
    $region7: #{tpu_custom_call.1} parent=1 // pred_check_branch
      %29 = sbr.rel (0) target = $region9
    $region8: #{tpu_custom_call.1} parent=1 // pred_region
      %s31 = ssub.s32 512, 512
      %32 = vsyncadd [#allocation6], %s31
      %s33 = sshll.u32 [#allocation5], 4
      %s34 = int_to_ptr.vmem [resolvable:$true] %s33
      %39 = dma.hbm_to_vmem [thread:$0]  %s1, 512, %s34, [#allocation6], 64, 64, 4
    $region9: #{tpu_custom_call.1} parent=1 // pred_fallthru
      _
    // Predicated region
    $region10: #{tpu_custom_call.1} parent=1 // pred_check
      _
    $region11: #{tpu_custom_call.1} parent=1 // pred_check_branch
      %41 = sbr.rel (0) target = $region13
    $region12: #{tpu_custom_call.1} parent=1 // pred_region
      _
    $region13: #{tpu_custom_call.1} parent=1 // pred_fallthru
      _
    // Predicated region
    $region14: #{tpu_custom_call.1} parent=1 // pred_check
      _
    $region15: #{tpu_custom_call.1} parent=1 // pred_check_branch
      %43 = sbr.rel (0) target = $region17
    $region16: #{tpu_custom_call.1} parent=1 // pred_region
      %s45 = ssub.s32 1024, 1024
      %46 = vsyncadd [#allocation6], %s45
      %s47 = sshll.u32 [#allocation7], 4
      %s48 = int_to_ptr.vmem [resolvable:$true] %s47
      %53 = dma.hbm_to_vmem [thread:$0]  %s3, 1024, %s48, [#allocation6], 64, 64, 4
    $region17: #{tpu_custom_call.1} parent=1 // pred_fallthru
      _
    // Predicated region
    $region18: #{tpu_custom_call.1} parent=1 // pred_check
      _
    $region19: #{tpu_custom_call.1} parent=1 // pred_check_branch
      %55 = sbr.rel (0) target = $region21
    $region20: #{tpu_custom_call.1} parent=1 // pred_region
      _
    $region21: #{tpu_custom_call.1} parent=1 // pred_fallthru
      _
    // Predicated region
    $region22: #{tpu_custom_call.1} parent=1 // pred_check
      _
    $region23: #{tpu_custom_call.1} parent=1 // pred_check_branch
      %57 = sbr.rel (0) target = $region25
    $region24: #{tpu_custom_call.1} parent=1 // pred_region
      %s59 = ssub.s32 1024, 1024
      %60 = vsyncadd [#allocation9], %s59
      %s61 = sshll.u32 [#allocation8], 4
      %s62 = int_to_ptr.vmem [resolvable:$true] %s61
      %67 = dma.hbm_to_vmem [thread:$0]  %s5, 1024, %s62, [#allocation9], 64, 64, 4
    $region25: #{tpu_custom_call.1} parent=1 // pred_fallthru
      _
    // Predicated region
    $region26: #{tpu_custom_call.1} parent=1 // pred_check
      _
    $region27: #{tpu_custom_call.1} parent=1 // pred_check_branch
      %69 = sbr.rel (0) target = $region29
    $region28: #{tpu_custom_call.1} parent=1 // pred_region
      _
    $region29: #{tpu_custom_call.1} parent=1 // pred_fallthru
      _
    // Predicated region
    $region30: #{tpu_custom_call.1} parent=1 // pred_check
      _
    $region31: #{tpu_custom_call.1} parent=1 // pred_check_branch
      %71 = sbr.rel (0) target = $region33
    $region32: #{tpu_custom_call.1} parent=1 // pred_region
      %72 = dma.done [#allocation3], 512
    $region33: #{tpu_custom_call.1} parent=1 // pred_fallthru
      _
    // Predicated region
    $region34: #{tpu_custom_call.1} parent=1 // pred_check
      _
    $region35: #{tpu_custom_call.1} parent=1 // pred_check_branch
      %74 = sbr.rel (0) target = $region37
    $region36: #{tpu_custom_call.1} parent=1 // pred_region
      %75 = dma.done [#allocation6], 512
    $region37: #{tpu_custom_call.1} parent=1 // pred_fallthru
      _
    // Predicated region
    $region38: #{tpu_custom_call.1} parent=1 // pred_check
      _
    $region39: #{tpu_custom_call.1} parent=1 // pred_check_branch
      %77 = sbr.rel (0) target = $region41
    $region40: #{tpu_custom_call.1} parent=1 // pred_region
      %78 = dma.done [#allocation6], 1024
    $region41: #{tpu_custom_call.1} parent=1 // pred_fallthru
      _
    // Predicated region
    $region42: #{tpu_custom_call.1} parent=1 // pred_check
      _
    $region43: #{tpu_custom_call.1} parent=1 // pred_check_branch
      %80 = sbr.rel (0) target = $region45
    $region44: #{tpu_custom_call.1} parent=1 // pred_region
      %81 = dma.done [#allocation9], 1024
    $region45: #{tpu_custom_call.1} parent=1 // pred_fallthru
      _
    %v83 = vld [vmem:[#allocation2] sm:$0xff]
    %v84 = vld [vmem:[#allocation2 + $0x8] sm:$0xff]
    %v85 = vld [vmem:[#allocation2 + $0x10] sm:$0xff]
    %v86 = vld [vmem:[#allocation2 + $0x18] sm:$0xff]
    %v87 = vpack.c.bf16 %v84, %v83
    %v88 = vpack.c.bf16 %v86, %v85
    %v89 = vld [vmem:[#allocation5] sm:$0xf]
    %v90 = vld [vmem:[#allocation5 + $0x4] sm:$0xf]
    %v91 = vld [vmem:[#allocation5 + $0x8] sm:$0xf]
    %v92 = vld [vmem:[#allocation5 + $0xc] sm:$0xf]
    %v93 = vld [vmem:[#allocation5 + $0x10] sm:$0xf]
    %v94 = vld [vmem:[#allocation5 + $0x14] sm:$0xf]
    %v95 = vld [vmem:[#allocation5 + $0x18] sm:$0xf]
    %v96 = vld [vmem:[#allocation5 + $0x1c] sm:$0xf]
    %v97 = vld [vmem:[%s2] sm:$0x1]
    %v99 = vlaneseq
    %v100 = vshrl.u32 %v99, 7
    %v101 = vsub.s32 0, %v100
    %v102 = vrot.slane %v97, %v101
    %v112 = vunpack.c.l.b16 %v89
    %v113 = vunpack.c.l.b16 %v90
    %v114 = vunpack.c.l.b16 %v91
    %v115 = vunpack.c.l.b16 %v92
    %v116 = vunpack.c.l.b16 %v93
    %v117 = vunpack.c.l.b16 %v94
    %v118 = vunpack.c.l.b16 %v95
    %v119 = vunpack.c.l.b16 %v96
    %v120 = vpack.c.b16 %v113, %v112
    %v121 = vpack.c.b16 %v115, %v114
    %v122 = vpack.c.b16 %v117, %v116
    %v123 = vpack.c.b16 %v119, %v118
    %vm128 = vcmask 523264
    %v130 = vsel %vm128, %v87, 0
    %v133 = vsel %vm128, %v88, 0
    %135 = vmatprep.subr.bf16.mxu0 0
    %136 = vmatpush1.bf16.msra.mxu0 %v120
    %137 = vmatprep.subr.bf16.mxu0 0
    %138 = vmatpush1.bf16.msra.mxu0 %v121
    %139 = vmatprep.subr.bf16.mxu0 0
    %140 = vmatpush1.bf16.msra.mxu0 %v122
    %141 = vmatprep.subr.bf16.mxu0 0
    %142 = vmatpush1.bf16.msra.mxu0 %v123
    %143 = vmatprep.subr.bf16.mxu0 0
    %144 = vmatpush1.bf16.msra.mxu0 0
    %145 = vmatprep.subr.bf16.mxu0 0
    %146 = vmatpush1.bf16.msra.mxu0 0
    %147 = vmatprep.subr.bf16.mxu0 0
    %148 = vmatpush1.bf16.msra.mxu0 0
    %149 = vmatprep.subr.bf16.mxu0 0
    %150 = vmatpush1.bf16.msra.mxu0 0
    %151 = vmatprep.subr.bf16.mxu0 0
    %152 = vmatpush1.bf16.msra.mxu0 0
    %153 = vmatprep.subr.bf16.mxu0 0
    %154 = vmatpush1.bf16.msra.mxu0 0
    %155 = vmatprep.subr.bf16.mxu0 0
    %156 = vmatpush1.bf16.msra.mxu0 0
    %157 = vmatprep.subr.bf16.mxu0 0
    %158 = vmatpush1.bf16.msra.mxu0 0
    %159 = vmatprep.subr.bf16.mxu0 0
    %160 = vmatpush1.bf16.msra.mxu0 0
    %161 = vmatprep.subr.bf16.mxu0 0
    %162 = vmatpush1.bf16.msra.mxu0 0
    %163 = vmatprep.subr.bf16.mxu0 0
    %164 = vmatpush1.bf16.msra.mxu0 0
    %165 = vmatprep.subr.bf16.mxu0 0
    %166 = vmatpush1.bf16.msra.mxu0 0
    %167 = vmatprep.mubr.bf16.mxu0 0
    %168 = vmatmul.mubr.bf16.gmra.mrb[0].mxu0 %v130
    %v169 = vpop.f32.mrb[0].mxu0
    %v170 = vadd.f32 %v102, %v169
    %v171 = vpop.f32.mrb[0].mxu0
    %v172 = vpop.f32.mrb[0].mxu0
    %v173 = vadd.f32 %v102, %v172
    %v174 = vpop.f32.mrb[0].mxu0
    %175 = vmatprep.mubr.bf16.mxu0 0
    %176 = vmatmul.mubr.bf16.gmra.mrb[0].mxu0 %v133
    %v177 = vpop.f32.mrb[0].mxu0
    %v178 = vadd.f32 %v102, %v177
    %v179 = vpop.f32.mrb[0].mxu0
    %v180 = vpop.f32.mrb[0].mxu0
    %v181 = vadd.f32 %v102, %v180
    %v182 = vpop.f32.mrb[0].mxu0
    %183 = vdwg.mxu0
    %v184 = vmax.f32 %v170, 0.0
    %v185 = vmax.f32 %v173, 0.0
    %v186 = vmax.f32 %v178, 0.0
    %v187 = vmax.f32 %v181, 0.0
    %v188 = vpack.c.bf16 %v185, %v184
    %v189 = vpack.c.bf16 %v187, %v186
    %v190 = vld [vmem:[#allocation7] sm:$0xf]
    %v191 = vld [vmem:[#allocation7 + $0x4] sm:$0xf]
    %v192 = vld [vmem:[#allocation7 + $0x8] sm:$0xf]
    %v193 = vld [vmem:[#allocation7 + $0xc] sm:$0xf]
    %v194 = vld [vmem:[#allocation7 + $0x10] sm:$0xf]
    %v195 = vld [vmem:[#allocation7 + $0x14] sm:$0xf]
    %v196 = vld [vmem:[#allocation7 + $0x18] sm:$0xf]
    %v197 = vld [vmem:[#allocation7 + $0x1c] sm:$0xf]
    %v198 = vld [vmem:[#allocation7 + $0x20] sm:$0xf]
    %v199 = vld [vmem:[#allocation7 + $0x24] sm:$0xf]
    %v200 = vld [vmem:[#allocation7 + $0x28] sm:$0xf]
    %v201 = vld [vmem:[#allocation7 + $0x2c] sm:$0xf]
    %v202 = vld [vmem:[#allocation7 + $0x30] sm:$0xf]
    %v203 = vld [vmem:[#allocation7 + $0x34] sm:$0xf]
    %v204 = vld [vmem:[#allocation7 + $0x38] sm:$0xf]
    %v205 = vld [vmem:[#allocation7 + $0x3c] sm:$0xf]
    %v206 = vld [vmem:[%s4] sm:$0x1]
    %v208 = vlaneseq
    %v209 = vshrl.u32 %v208, 7
    %v210 = vsub.s32 0, %v209
    %v211 = vrot.slane %v206, %v210
    %v229 = vunpack.c.l.b16 %v190
    %v230 = vunpack.c.l.b16 %v191
    %v231 = vunpack.c.l.b16 %v192
    %v232 = vunpack.c.l.b16 %v193
    %v233 = vunpack.c.l.b16 %v194
    %v234 = vunpack.c.l.b16 %v195
    %v235 = vunpack.c.l.b16 %v196
    %v236 = vunpack.c.l.b16 %v197
    %v237 = vunpack.c.l.b16 %v198
    %v238 = vunpack.c.l.b16 %v199
    %v239 = vunpack.c.l.b16 %v200
    %v240 = vunpack.c.l.b16 %v201
    %v241 = vunpack.c.l.b16 %v202
    %v242 = vunpack.c.l.b16 %v203
    %v243 = vunpack.c.l.b16 %v204
    %v244 = vunpack.c.l.b16 %v205
    %v245 = vpack.c.b16 %v230, %v229
    %v246 = vpack.c.b16 %v232, %v231
    %v247 = vpack.c.b16 %v234, %v233
    %v248 = vpack.c.b16 %v236, %v235
    %v249 = vpack.c.b16 %v238, %v237
    %v250 = vpack.c.b16 %v240, %v239
    %v251 = vpack.c.b16 %v242, %v241
    %v252 = vpack.c.b16 %v244, %v243
    %261 = vmatprep.subr.bf16.mxu0 0
    %262 = vmatpush1.bf16.msra.mxu0 %v245
    %263 = vmatprep.subr.bf16.mxu0 0
    %264 = vmatpush1.bf16.msra.mxu0 %v246
    %265 = vmatprep.subr.bf16.mxu0 0
    %266 = vmatpush1.bf16.msra.mxu0 %v247
    %267 = vmatprep.subr.bf16.mxu0 0
    %268 = vmatpush1.bf16.msra.mxu0 %v248
    %269 = vmatprep.subr.bf16.mxu0 0
    %270 = vmatpush1.bf16.msra.mxu0 %v249
    %271 = vmatprep.subr.bf16.mxu0 0
    %272 = vmatpush1.bf16.msra.mxu0 %v250
    %273 = vmatprep.subr.bf16.mxu0 0
    %274 = vmatpush1.bf16.msra.mxu0 %v251
    %275 = vmatprep.subr.bf16.mxu0 0
    %276 = vmatpush1.bf16.msra.mxu0 %v252
    %277 = vmatprep.subr.bf16.mxu0 0
    %278 = vmatpush1.bf16.msra.mxu0 0
    %279 = vmatprep.subr.bf16.mxu0 0
    %280 = vmatpush1.bf16.msra.mxu0 0
    %281 = vmatprep.subr.bf16.mxu0 0
    %282 = vmatpush1.bf16.msra.mxu0 0
    %283 = vmatprep.subr.bf16.mxu0 0
    %284 = vmatpush1.bf16.msra.mxu0 0
    %285 = vmatprep.subr.bf16.mxu0 0
    %286 = vmatpush1.bf16.msra.mxu0 0
    %287 = vmatprep.subr.bf16.mxu0 0
    %288 = vmatpush1.bf16.msra.mxu0 0
    %289 = vmatprep.subr.bf16.mxu0 0
    %290 = vmatpush1.bf16.msra.mxu0 0
    %291 = vmatprep.subr.bf16.mxu0 0
    %292 = vmatpush1.bf16.msra.mxu0 0
    %293 = vmatprep.mubr.bf16.mxu0 0
    %294 = vmatmul.mubr.bf16.gmra.mrb[0].mxu0 %v188
    %v295 = vpop.f32.mrb[0].mxu0
    %v296 = vadd.f32 %v211, %v295
    %v297 = vpop.f32.mrb[0].mxu0
    %v298 = vpop.f32.mrb[0].mxu0
    %v299 = vadd.f32 %v211, %v298
    %v300 = vpop.f32.mrb[0].mxu0
    %301 = vmatprep.mubr.bf16.mxu0 0
    %302 = vmatmul.mubr.bf16.gmra.mrb[0].mxu0 %v189
    %v303 = vpop.f32.mrb[0].mxu0
    %v304 = vadd.f32 %v211, %v303
    %v305 = vpop.f32.mrb[0].mxu0
    %v306 = vpop.f32.mrb[0].mxu0
    %v307 = vadd.f32 %v211, %v306
    %v308 = vpop.f32.mrb[0].mxu0
    %309 = vdwg.mxu0
    %v310 = vmax.f32 %v296, 0.0
    %v311 = vmax.f32 %v299, 0.0
    %v312 = vmax.f32 %v304, 0.0
    %v313 = vmax.f32 %v307, 0.0
    %v314 = vpack.c.bf16 %v311, %v310
    %v315 = vpack.c.bf16 %v313, %v312
    %v316 = vld [vmem:[#allocation8] sm:$0xf]
    %v317 = vld [vmem:[#allocation8 + $0x4] sm:$0xf]
    %v318 = vld [vmem:[#allocation8 + $0x8] sm:$0xf]
    %v319 = vld [vmem:[#allocation8 + $0xc] sm:$0xf]
    %v320 = vld [vmem:[#allocation8 + $0x10] sm:$0xf]
    %v321 = vld [vmem:[#allocation8 + $0x14] sm:$0xf]
    %v322 = vld [vmem:[#allocation8 + $0x18] sm:$0xf]
    %v323 = vld [vmem:[#allocation8 + $0x1c] sm:$0xf]
    %v324 = vld [vmem:[#allocation8 + $0x20] sm:$0xf]
    %v325 = vld [vmem:[#allocation8 + $0x24] sm:$0xf]
    %v326 = vld [vmem:[#allocation8 + $0x28] sm:$0xf]
    %v327 = vld [vmem:[#allocation8 + $0x2c] sm:$0xf]
    %v328 = vld [vmem:[#allocation8 + $0x30] sm:$0xf]
    %v329 = vld [vmem:[#allocation8 + $0x34] sm:$0xf]
    %v330 = vld [vmem:[#allocation8 + $0x38] sm:$0xf]
    %v331 = vld [vmem:[#allocation8 + $0x3c] sm:$0xf]
    %v332 = vld [vmem:[%s6] sm:$0x1]
    %v334 = vlaneseq
    %v335 = vshrl.u32 %v334, 7
    %v336 = vsub.s32 0, %v335
    %v337 = vrot.slane %v332, %v336
    %v355 = vunpack.c.l.b16 %v316
    %v356 = vunpack.c.l.b16 %v317
    %v357 = vunpack.c.l.b16 %v318
    %v358 = vunpack.c.l.b16 %v319
    %v359 = vunpack.c.l.b16 %v320
    %v360 = vunpack.c.l.b16 %v321
    %v361 = vunpack.c.l.b16 %v322
    %v362 = vunpack.c.l.b16 %v323
    %v363 = vunpack.c.l.b16 %v324
    %v364 = vunpack.c.l.b16 %v325
    %v365 = vunpack.c.l.b16 %v326
    %v366 = vunpack.c.l.b16 %v327
    %v367 = vunpack.c.l.b16 %v328
    %v368 = vunpack.c.l.b16 %v329
    %v369 = vunpack.c.l.b16 %v330
    %v370 = vunpack.c.l.b16 %v331
    %v371 = vpack.c.b16 %v356, %v355
    %v372 = vpack.c.b16 %v358, %v357
    %v373 = vpack.c.b16 %v360, %v359
    %v374 = vpack.c.b16 %v362, %v361
    %v375 = vpack.c.b16 %v364, %v363
    %v376 = vpack.c.b16 %v366, %v365
    %v377 = vpack.c.b16 %v368, %v367
    %v378 = vpack.c.b16 %v370, %v369
    %387 = vmatprep.subr.bf16.mxu0 0
    %388 = vmatpush1.bf16.msra.mxu0 %v371
    %389 = vmatprep.subr.bf16.mxu0 0
    %390 = vmatpush1.bf16.msra.mxu0 %v372
    %391 = vmatprep.subr.bf16.mxu0 0
    %392 = vmatpush1.bf16.msra.mxu0 %v373
    %393 = vmatprep.subr.bf16.mxu0 0
    %394 = vmatpush1.bf16.msra.mxu0 %v374
    %395 = vmatprep.subr.bf16.mxu0 0
    %396 = vmatpush1.bf16.msra.mxu0 %v375
    %397 = vmatprep.subr.bf16.mxu0 0
    %398 = vmatpush1.bf16.msra.mxu0 %v376
    %399 = vmatprep.subr.bf16.mxu0 0
    %400 = vmatpush1.bf16.msra.mxu0 %v377
    %401 = vmatprep.subr.bf16.mxu0 0
    %402 = vmatpush1.bf16.msra.mxu0 %v378
    %403 = vmatprep.subr.bf16.mxu0 0
    %404 = vmatpush1.bf16.msra.mxu0 0
    %405 = vmatprep.subr.bf16.mxu0 0
    %406 = vmatpush1.bf16.msra.mxu0 0
    %407 = vmatprep.subr.bf16.mxu0 0
    %408 = vmatpush1.bf16.msra.mxu0 0
    %409 = vmatprep.subr.bf16.mxu0 0
    %410 = vmatpush1.bf16.msra.mxu0 0
    %411 = vmatprep.subr.bf16.mxu0 0
    %412 = vmatpush1.bf16.msra.mxu0 0
    %413 = vmatprep.subr.bf16.mxu0 0
    %414 = vmatpush1.bf16.msra.mxu0 0
    %415 = vmatprep.subr.bf16.mxu0 0
    %416 = vmatpush1.bf16.msra.mxu0 0
    %417 = vmatprep.subr.bf16.mxu0 0
    %418 = vmatpush1.bf16.msra.mxu0 0
    %419 = vmatprep.mubr.bf16.mxu0 0
    %420 = vmatmul.mubr.bf16.gmra.mrb[0].mxu0 %v314
    %v421 = vpop.f32.mrb[0].mxu0
    %v422 = vadd.f32 %v337, %v421
    %v423 = vpop.f32.mrb[0].mxu0
    %v424 = vpop.f32.mrb[0].mxu0
    %v425 = vadd.f32 %v337, %v424
    %v426 = vpop.f32.mrb[0].mxu0
    %427 = vmatprep.mubr.bf16.mxu0 0
    %428 = vmatmul.mubr.bf16.gmra.mrb[0].mxu0 %v315
    %v429 = vpop.f32.mrb[0].mxu0
    %v430 = vadd.f32 %v337, %v429
    %v431 = vpop.f32.mrb[0].mxu0
    %v432 = vpop.f32.mrb[0].mxu0
    %v433 = vadd.f32 %v337, %v432
    %v434 = vpop.f32.mrb[0].mxu0
    %435 = vdwg.mxu0
    %436 = vst [vmem:[#allocation10] sm:$0xff] %v422
    %437 = vst [vmem:[#allocation10 + $0x8] sm:$0xff] %v425
    %438 = vst [vmem:[#allocation10 + $0x10] sm:$0xff] %v430
    %439 = vst [vmem:[#allocation10 + $0x18] sm:$0xff] %v433
    // Predicated region
    $region46: #{tpu_custom_call.1} parent=1 // pred_check
      _
    $region47: #{tpu_custom_call.1} parent=1 // pred_check_branch
      %441 = sbr.rel (0) target = $region49
    $region48: #{tpu_custom_call.1} parent=1 // pred_region
      %s443 = ssub.s32 512, 512
      %444 = vsyncadd [#allocation4], %s443
      %s445 = sshll.u32 [#allocation10], 4
      %s446 = int_to_ptr.vmem [resolvable:$true] %s445
      %451 = dma.vmem_to_hbm [thread:$0]  %s446, 512, %s7, [#allocation4], 128, 128, 8
    $region49: #{tpu_custom_call.1} parent=1 // pred_fallthru
      _
    // Predicated region
    $region50: #{tpu_custom_call.1} parent=1 // pred_check
      _
    $region51: #{tpu_custom_call.1} parent=1 // pred_check_branch
      %453 = sbr.rel (0) target = $region53
    $region52: #{tpu_custom_call.1} parent=1 // pred_region
      %454 = dma.done [#allocation4], 512
    $region53: #{tpu_custom_call.1} parent=1 // pred_fallthru
      _
    %455 = vsyncpa [#allocation3], 1
    %456 = vsyncpa [#allocation6], 1
    %457 = vsyncpa [#allocation9], 1
    %458 = vsyncpa [#allocation4], 1

</llo_original>
